<compile_context>
chip_gen: v5e
topology: v5e:2x2
jax: 0.10.0
libtpu: 0.0.40
codegen_flags: <defaults>
</compile_context>

<pallas_src>
import jax
import jax.numpy as jnp
from jax.experimental import pallas as pl
from jax.experimental.pallas import tpu as pltpu

_EPS_SSQ = 1e-24  # eps on sum-of-squares (== 1e-12 on the norm), guards 0-rows


def spoc_kernel(x_ref, pca_ref, o_ref, acc_ref):
    # x_ref:   (B_tile, C, S_tile)  native dtype  -- NCHW input, spatial flattened
    # pca_ref: (C, D_pad)           float32       -- PCA matrix with 1/sv folded in
    # o_ref:   (B_tile, D_pad)      float32       -- output descriptors (padded)
    # acc_ref: (B_tile, C)          float32       -- spatial-sum accumulator
    s = pl.program_id(1)

    @pl.when(s == 0)
    def _():
        acc_ref[...] = jnp.zeros_like(acc_ref)

    # --- SpocBeforeDimensionReduction: sum-pool over spatial positions ---
    acc_ref[...] += jnp.sum(x_ref[...].astype(jnp.float32), axis=-1)

    @pl.when(s == pl.num_programs(1) - 1)
    def _():
        spocs = acc_ref[...]                                        # (Bt, C)

        # --- L2 normalization before dimension reduction (rsqrt * x) ---
        ssq1 = jnp.sum(spocs * spocs, axis=1, keepdims=True)
        spocs = spocs * jax.lax.rsqrt(jnp.maximum(ssq1, _EPS_SSQ))

        # --- PCA projection; 1/singular_values already folded into pca_ref ---
        proj = jnp.dot(spocs, pca_ref[...],
                       preferred_element_type=jnp.float32)          # (Bt, D_pad)

        # --- L2 normalization after dimension reduction ---
        ssq2 = jnp.sum(proj * proj, axis=1, keepdims=True)
        o_ref[...] = (proj * jax.lax.rsqrt(jnp.maximum(ssq2, _EPS_SSQ))
                      ).astype(o_ref.dtype)


def _pick_batch_tile(B):
    # Keep the output block's sublane dim legal: either full B or a
    # multiple-of-8 divisor of B.
    if B <= 8:
        return B
    for cand in (16, 8):
        if B % cand == 0:
            return cand
    return B


def _pick_spatial_tile(S, B_tile, C, itemsize, budget_bytes=8 * 1024 * 1024):
    # Largest lane-dense (multiple-of-128) tile that divides S and keeps a
    # single x block within ~8 MiB (double-buffered by the pipeline), so it
    # fits scoped VMEM on v5e (16 MiB) / v6e (32 MiB) / v7x (64 MiB physical).
    fitting = [c for c in (1024, 512, 256, 128)
               if S % c == 0 and B_tile * C * c * itemsize <= budget_bytes]
    if fitting:
        return fitting[0]
    divisible = [c for c in (256, 128) if S % c == 0]
    if divisible:
        return divisible[-1]
    return S  # fall back to full spatial extent (non-128-multiple S)


def spoc_forward(x_nchw, pca_matrix, singular_values):
    """x_nchw: (B, C, H, W); pca_matrix: (C, D); singular_values: (D,)."""
    B, C, H, W = x_nchw.shape
    S = H * W
    D = pca_matrix.shape[1]

    # Fold 1/singular_values into the projection matrix (free at call-prep).
    pca_scaled = (pca_matrix.astype(jnp.float32)
                  / singular_values.astype(jnp.float32)[None, :])

    # Pad output width to a lane-dense multiple of 128; zero columns do not
    # change the L2 norm, so the in-kernel normalization stays correct.
    D_pad = max(128, ((D + 127) // 128) * 128)
    if D_pad != D:
        pca_scaled = jnp.pad(pca_scaled, ((0, 0), (0, D_pad - D)))

    # Keep x in its native dtype (no HBM-doubling f32 upcast), spatial last.
    x = x_nchw.reshape(B, C, S)

    B_tile = _pick_batch_tile(B)
    S_tile = _pick_spatial_tile(S, B_tile, C, x.dtype.itemsize)
    grid = (B // B_tile, pl.cdiv(S, S_tile))

    out = pl.pallas_call(
        spoc_kernel,
        out_shape=jax.ShapeDtypeStruct((B, D_pad), jnp.float32),
        grid_spec=pltpu.PrefetchScalarGridSpec(
            num_scalar_prefetch=0,
            grid=grid,
            in_specs=[
                pl.BlockSpec((B_tile, C, S_tile), lambda b, s: (b, 0, s)),
                pl.BlockSpec((C, D_pad), lambda b, s: (0, 0)),  # resident
            ],
            out_specs=pl.BlockSpec((B_tile, D_pad), lambda b, s: (b, 0)),
            scratch_shapes=[pltpu.VMEM((B_tile, C), jnp.float32)],
        ),
        compiler_params=pltpu.CompilerParams(
            dimension_semantics=("parallel", "arbitrary"),
            vmem_limit_bytes=32 * 1024 * 1024,
        ),
    )(x, pca_scaled)

    return out[:, :D]


def reference_forward(x_nchw, pca_matrix, singular_values):
    B, C = x_nchw.shape[0], x_nchw.shape[1]
    spocs = jnp.sum(x_nchw.reshape(B, C, -1).astype(jnp.float32), axis=2)
    spocs = spocs / jnp.linalg.norm(spocs, axis=1, keepdims=True)
    spocs = (spocs @ pca_matrix.astype(jnp.float32)) / singular_values
    spocs = spocs / jnp.linalg.norm(spocs, axis=1, keepdims=True)
    return spocs


if __name__ == "__main__":
    # Small deterministic shapes: batch=2, channels=4, spatial=32x32 (S=1024,
    # so the grid actually takes multiple spatial reduction steps), out dim=32.
    B, C, H, W, D = 2, 4, 32, 32, 32
    key = jax.random.PRNGKey(0)
    kx, kp, ks = jax.random.split(key, 3)

    x = jax.random.normal(kx, (B, C, H, W), dtype=jnp.float32)
    # Deterministic synthetic parameters (shapes implied by __init__):
    #   pca_matrix: (C, D), singular_values: (D,) strictly positive.
    pca_matrix = jax.random.normal(kp, (C, D), dtype=jnp.float32)
    singular_values = jax.random.uniform(
        ks, (D,), dtype=jnp.float32, minval=0.5, maxval=1.5)

    out = spoc_forward(x, pca_matrix, singular_values)
    out = jax.block_until_ready(out)

    ref = reference_forward(x, pca_matrix, singular_values)
    assert out.shape == (B, D)
    assert jnp.allclose(out, ref, atol=1e-5, rtol=1e-5)

    print("KERNEL_OK")
</pallas_src>

<mosaic_0001>
module attributes {stable_mosaic.version = 11 : i64} {
  func.func @spoc_kernel(%arg0: i32, %arg1: i32, %arg2: memref<2x4x1024xf32, #tpu.memory_space<vmem>>, %arg3: memref<4x128xf32, #tpu.memory_space<vmem>>, %arg4: memref<2x128xf32, #tpu.memory_space<vmem>>, %arg5: memref<2x4xf32, #tpu.memory_space<vmem>>) attributes {dimension_semantics = [#tpu.dimension_semantics<parallel>, #tpu.dimension_semantics<arbitrary>], iteration_bounds = array<i64: 1, 1>, scalar_prefetch = 0 : i64, scratch_operands = 1 : i64, tpu.core_type = #tpu.core_type<tc>, window_params = [{transform_indices = @transform_0, window_bounds = array<i64: 2, 4, 1024>}, {pipeline_mode = #tpu.pipeline_mode<synchronous>, transform_indices = @transform_1, window_bounds = array<i64: 4, 128>}, {transform_indices = @transform_2, window_bounds = array<i64: 2, 128>}]} {
    %c0_i32 = arith.constant 0 : i32
    %0 = arith.cmpi eq, %arg1, %c0_i32 : i32
    %1 = arith.extui %0 : i1 to i32
    %c0_i32_0 = arith.constant 0 : i32
    %2 = arith.cmpi ne, %1, %c0_i32_0 : i32
    scf.if %2 {
      %cst_9 = arith.constant 0.000000e+00 : f32
      %11 = vector.broadcast %cst_9 : f32 to vector<2x4xf32>
      %c0_10 = arith.constant 0 : index
      %c0_11 = arith.constant 0 : index
      %12 = vector.load %arg5[%c0_10, %c0_11] : memref<2x4xf32, #tpu.memory_space<vmem>>, vector<2x4xf32>
      tpu.vector_store %arg5[%c0_10, %c0_11], %11 {strides = array<i32>} : memref<2x4xf32, #tpu.memory_space<vmem>>, vector<2x4xf32>,
    } else {
    }
    %c0 = arith.constant 0 : index
    %c0_1 = arith.constant 0 : index
    %3 = vector.load %arg5[%c0, %c0_1] : memref<2x4xf32, #tpu.memory_space<vmem>>, vector<2x4xf32>
    %c0_2 = arith.constant 0 : index
    %c0_3 = arith.constant 0 : index
    %c0_4 = arith.constant 0 : index
    %4 = vector.load %arg2[%c0_2, %c0_3, %c0_4] : memref<2x4x1024xf32, #tpu.memory_space<vmem>>, vector<2x4x1024xf32>
    %cst = arith.constant dense<0.000000e+00> : vector<2x4xf32>
    %5 = vector.multi_reduction <add>, %4, %cst [2] : vector<2x4x1024xf32> to vector<2x4xf32>
    %6 = arith.addf %3, %5 : vector<2x4xf32>
    %c0_5 = arith.constant 0 : index
    %c0_6 = arith.constant 0 : index
    %7 = vector.load %arg5[%c0_5, %c0_6] : memref<2x4xf32, #tpu.memory_space<vmem>>, vector<2x4xf32>
    tpu.vector_store %arg5[%c0_5, %c0_6], %6 {strides = array<i32>} : memref<2x4xf32, #tpu.memory_space<vmem>>, vector<2x4xf32>,
    %c0_i32_7 = arith.constant 0 : i32
    %8 = arith.cmpi eq, %arg1, %c0_i32_7 : i32
    %9 = arith.extui %8 : i1 to i32
    %c0_i32_8 = arith.constant 0 : i32
    %10 = arith.cmpi ne, %9, %c0_i32_8 : i32
    scf.if %10 {
      %c0_9 = arith.constant 0 : index
      %c0_10 = arith.constant 0 : index
      %11 = vector.load %arg5[%c0_9, %c0_10] : memref<2x4xf32, #tpu.memory_space<vmem>>, vector<2x4xf32>
      %12 = arith.mulf %11, %11 : vector<2x4xf32>
      %cst_11 = arith.constant dense<0.000000e+00> : vector<2xf32>
      %13 = vector.multi_reduction <add>, %12, %cst_11 [1] : vector<2x4xf32> to vector<2xf32>
      %14 = vector.shape_cast %13 : vector<2xf32> to vector<2x1xf32>
      %cst_12 = arith.constant 1.000000e-24 : f32
      %15 = vector.broadcast %cst_12 : f32 to vector<2x1xf32>
      %16 = arith.maximumf %14, %15 : vector<2x1xf32>
      %17 = math.rsqrt %16 : vector<2x1xf32>
      %18 = vector.broadcast %17 : vector<2x1xf32> to vector<2x4xf32>
      %19 = arith.mulf %11, %18 : vector<2x4xf32>
      %c0_13 = arith.constant 0 : index
      %c0_14 = arith.constant 0 : index
      %20 = vector.load %arg3[%c0_13, %c0_14] : memref<4x128xf32, #tpu.memory_space<vmem>>, vector<4x128xf32>
      %cst_15 = arith.constant dense<0.000000e+00> : vector<2x128xf32>
      %21 = tpu.matmul %19, %20, %cst_15 {dimension_numbers = #tpu.dot_dimension_numbers<[1], [0], [0], [1], [0, 0, 1, 1], [], []>} : vector<2x4xf32>, vector<4x128xf32>, vector<2x128xf32> -> vector<2x128xf32>
      %22 = arith.mulf %21, %21 : vector<2x128xf32>
      %cst_16 = arith.constant dense<0.000000e+00> : vector<2xf32>
      %23 = vector.multi_reduction <add>, %22, %cst_16 [1] : vector<2x128xf32> to vector<2xf32>
      %24 = vector.shape_cast %23 : vector<2xf32> to vector<2x1xf32>
      %cst_17 = arith.constant 1.000000e-24 : f32
      %25 = vector.broadcast %cst_17 : f32 to vector<2x1xf32>
      %26 = arith.maximumf %24, %25 : vector<2x1xf32>
      %27 = math.rsqrt %26 : vector<2x1xf32>
      %28 = vector.broadcast %27 : vector<2x1xf32> to vector<2x128xf32>
      %29 = arith.mulf %21, %28 : vector<2x128xf32>
      %c0_18 = arith.constant 0 : index
      %c0_19 = arith.constant 0 : index
      %30 = vector.load %arg4[%c0_18, %c0_19] : memref<2x128xf32, #tpu.memory_space<vmem>>, vector<2x128xf32>
      tpu.vector_store %arg4[%c0_18, %c0_19], %29 {strides = array<i32>} : memref<2x128xf32, #tpu.memory_space<vmem>>, vector<2x128xf32>,
    } else {
    }
    return
  }
  func.func @transform_0(%arg0: i32, %arg1: i32) -> (i32, i32, i32) {
    %c0_i32 = arith.constant 0 : i32
    %c0_i32_0 = arith.constant 0 : i32
    return %arg0, %c0_i32, %arg1 : i32, i32, i32
  }
  func.func @transform_1(%arg0: i32, %arg1: i32) -> (i32, i32) {
    %c0_i32 = arith.constant 0 : i32
    %c0_i32_0 = arith.constant 0 : i32
    %c0_i32_1 = arith.constant 0 : i32
    return %c0_i32, %c0_i32_0 : i32, i32
  }
  func.func @transform_2(%arg0: i32, %arg1: i32) -> (i32, i32) {
    %c0_i32 = arith.constant 0 : i32
    %c0_i32_0 = arith.constant 0 : i32
    return %arg0, %c0_i32 : i32, i32
  }
}

</mosaic_0001>

<llo_original>
// kernel: tpu_custom_call.1
$region0: #{tpu_custom_call.1}
  #allocation0 [shape = 'u32[]', space=smem, size = 0x4, offset = 0x4, fixed_abs, tag = 'smem constant byte address 0x4 - core index']
  #allocation1 [shape = 'u32[72,128]{1,0:T(1,128)}', space=vmem, size = 0x9000, scoped, tag = 'internal scratch']
  #allocation2 [shape = 'f32[2,4]{1,0:T(2,128)}', space=vmem, size = 0x400, scoped, tag = 'scratch operand']
  %s0 = inlined_call_operand.hbm [shape: f32[2,4,1024], index: 0, kind: input, shape index: {}]
  %s1 = inlined_call_operand.hbm [shape: f32[4,128], index: 1, kind: input, shape index: {}]
  %s2 = inlined_call_operand.hbm [shape: f32[2,128], index: 2, kind: output, shape index: {}]
  %s3 = sld [smem:[#allocation0]]
  $region34: #{tpu_custom_call.1} parent=0
    _
  %s5 = ssub.s32 1, %s3
  %s6 = scalar_select 0, %s5, %s3
  $region1: #{tpu_custom_call.1} parent=0
    #allocation3 [shape = 'u8[32768]{0}', space=vmem, size = 0x8000, scoped, tag = 'input window, operand 0, single buffered']
    #allocation4 [shape = 's32[1]{0}', space=sflag, size = 0x4, scoped, tag = 'scoped memory for tpu_custom_call.1']
    #allocation5 [shape = 's32[1]{0}', space=sflag, size = 0x4, scoped, tag = 'scoped memory for tpu_custom_call.1']
    #allocation6 [shape = 'u8[2048]{0}', space=vmem, size = 0x800, scoped, tag = 'input window, operand 1, single buffered']
    #allocation7 [shape = 's32[1]{0}', space=sflag, size = 0x4, scoped, tag = 'scoped memory for tpu_custom_call.1']
    #allocation8 [shape = 'u8[1024]{0}', space=vmem, size = 0x400, scoped, tag = 'output window, operand 0, single buffered']
    %7 = vsyncpa [#allocation4], 0
    %8 = vsyncpa [#allocation7], 0
    %9 = vsyncpa [#allocation5], 0
    // Predicated region
    $region2: #{tpu_custom_call.1} parent=1 // pred_check
      _
    $region3: #{tpu_custom_call.1} parent=1 // pred_check_branch
      %11 = sbr.rel (0) target = $region5
    $region4: #{tpu_custom_call.1} parent=1 // pred_region
      %13 = vsyncadd [#allocation4], 0
      %s14 = sshll.u32 %s0, 4
      %s15 = int_to_ptr.hbm [resolvable:$true] %s14
      %s16 = sshll.u32 [#allocation3], 4
      %s17 = int_to_ptr.vmem [resolvable:$true] %s16
      %22 = dma.hbm_to_vmem [thread:$0]  %s15, 1024, %s17, [#allocation4], 512, 512, 32
    $region5: #{tpu_custom_call.1} parent=1 // pred_fallthru
      _
    // Predicated region
    $region6: #{tpu_custom_call.1} parent=1 // pred_check
      _
    $region7: #{tpu_custom_call.1} parent=1 // pred_check_branch
      %24 = sbr.rel (0) target = $region9
    $region8: #{tpu_custom_call.1} parent=1 // pred_region
      %26 = vsyncadd [#allocation7], 0
      %s28 = sshll.u32 %s1, 4
      %s29 = int_to_ptr.hbm [resolvable:$true] %s28
      %s30 = sshll.u32 [#allocation6], 4
      %s31 = int_to_ptr.vmem [resolvable:$true] %s30
      %33 = dma.hbm_to_vmem [thread:$0]  %s29, 64, %s31, [#allocation7]
    $region9: #{tpu_custom_call.1} parent=1 // pred_fallthru
      _
    // Predicated region
    $region10: #{tpu_custom_call.1} parent=1 // pred_check
      _
    $region11: #{tpu_custom_call.1} parent=1 // pred_check_branch
      %35 = sbr.rel (0) target = $region13
    $region12: #{tpu_custom_call.1} parent=1 // pred_region
      %37 = dma.done [#allocation4], 1024
    $region13: #{tpu_custom_call.1} parent=1 // pred_fallthru
      _
    // Predicated region
    $region14: #{tpu_custom_call.1} parent=1 // pred_check
      _
    $region15: #{tpu_custom_call.1} parent=1 // pred_check_branch
      %39 = sbr.rel (0) target = $region17
    $region16: #{tpu_custom_call.1} parent=1 // pred_region
      %41 = dma.done [#allocation7], 64
    $region17: #{tpu_custom_call.1} parent=1 // pred_fallthru
      _
    %p42 = scmp.eq.s32.totalorder 0, 0
    // Predicated region
    $region18: #{tpu_custom_call.1} parent=1 // pred_check
      %p43 = pneg %p42
    $region19: #{tpu_custom_call.1} parent=1 // pred_check_branch
      %45 = sbr.rel (%p43) target = $region21
    $region20: #{tpu_custom_call.1} parent=1 // pred_region
      %vm46 = vcmask 25600
      %47 = vst.msk [vmem:[#allocation2] sm:$0x3] %vm46, 0.0
    $region21: #{tpu_custom_call.1} parent=1 // pred_fallthru
      _
    %v48 = vld [vmem:[#allocation2] sm:$0x3]
    %v49 = vld [vmem:[#allocation3] sm:$0xff]
    %v50 = vld [vmem:[#allocation3 + $0x8] sm:$0xff]
    %v51 = vld [vmem:[#allocation3 + $0x10] sm:$0xff]
    %v52 = vld [vmem:[#allocation3 + $0x18] sm:$0xff]
    %v53 = vld [vmem:[#allocation3 + $0x20] sm:$0xff]
    %v54 = vld [vmem:[#allocation3 + $0x28] sm:$0xff]
    %v55 = vld [vmem:[#allocation3 + $0x30] sm:$0xff]
    %v56 = vld [vmem:[#allocation3 + $0x38] sm:$0xff]
    %65 = vst [vmem:[#allocation1] ss:$2 sm:$0xff] %v49
    %s66 = scalar_lea.vmem [#allocation1], 16
    %67 = vst [vmem:[%s66] ss:$2 sm:$0xff] %v50
    %s68 = scalar_lea.vmem [#allocation1], 32
    %69 = vst [vmem:[%s68] ss:$2 sm:$0xff] %v51
    %s70 = scalar_lea.vmem [#allocation1], 48
    %71 = vst [vmem:[%s70] ss:$2 sm:$0xff] %v52
    %v72 = vld.sshfl [vmem:[#allocation1] sm:$0xff pattern:$0x75316420]
    %v73 = vld.sshfl [vmem:[#allocation1 + $0x8] sm:$0xff pattern:$0x75316420]
    %v74 = vld.sshfl [vmem:[#allocation1 + $0x10] sm:$0xff pattern:$0x75316420]
    %v75 = vld.sshfl [vmem:[#allocation1 + $0x18] sm:$0xff pattern:$0x75316420]
    %v76 = vld.sshfl [vmem:[#allocation1 + $0x20] sm:$0xff pattern:$0x75316420]
    %v77 = vld.sshfl [vmem:[#allocation1 + $0x28] sm:$0xff pattern:$0x75316420]
    %v78 = vld.sshfl [vmem:[#allocation1 + $0x30] sm:$0xff pattern:$0x75316420]
    %v79 = vld.sshfl [vmem:[#allocation1 + $0x38] sm:$0xff pattern:$0x75316420]
    %80 = vst [vmem:[#allocation1] ss:$2 sm:$0xff] %v53
    %81 = vst [vmem:[%s66] ss:$2 sm:$0xff] %v54
    %82 = vst [vmem:[%s68] ss:$2 sm:$0xff] %v55
    %83 = vst [vmem:[%s70] ss:$2 sm:$0xff] %v56
    %v84 = vld.sshfl [vmem:[#allocation1] sm:$0xff pattern:$0x75316420]
    %v85 = vld.sshfl [vmem:[#allocation1 + $0x8] sm:$0xff pattern:$0x75316420]
    %v86 = vld.sshfl [vmem:[#allocation1 + $0x10] sm:$0xff pattern:$0x75316420]
    %v87 = vld.sshfl [vmem:[#allocation1 + $0x18] sm:$0xff pattern:$0x75316420]
    %v88 = vld.sshfl [vmem:[#allocation1 + $0x20] sm:$0xff pattern:$0x75316420]
    %v89 = vld.sshfl [vmem:[#allocation1 + $0x28] sm:$0xff pattern:$0x75316420]
    %v90 = vld.sshfl [vmem:[#allocation1 + $0x30] sm:$0xff pattern:$0x75316420]
    %v91 = vld.sshfl [vmem:[#allocation1 + $0x38] sm:$0xff pattern:$0x75316420]
    %vm108 = vcmask 1043456
    %v109 = vsel %vm108, %v72, 0.0
    %v110 = vsel %vm108, %v73, 0.0
    %v111 = vadd.f32 %v109, %v110
    %v112 = vsel %vm108, %v74, 0.0
    %v113 = vadd.f32 %v111, %v112
    %v114 = vsel %vm108, %v75, 0.0
    %v115 = vadd.f32 %v113, %v114
    %v116 = vsel %vm108, %v76, 0.0
    %v117 = vadd.f32 %v115, %v116
    %v118 = vsel %vm108, %v77, 0.0
    %v119 = vadd.f32 %v117, %v118
    %v120 = vsel %vm108, %v78, 0.0
    %v121 = vadd.f32 %v119, %v120
    %v122 = vsel %vm108, %v79, 0.0
    %v123 = vadd.f32 %v121, %v122
    %124 = vadd.xlane.f32.xlu0 %v123
    %v125 = vpop.xlane.xlu0 %124
    %v126 = vsel %vm108, %v84, 0.0
    %v127 = vsel %vm108, %v85, 0.0
    %v128 = vadd.f32 %v126, %v127
    %v129 = vsel %vm108, %v86, 0.0
    %v130 = vadd.f32 %v128, %v129
    %v131 = vsel %vm108, %v87, 0.0
    %v132 = vadd.f32 %v130, %v131
    %v133 = vsel %vm108, %v88, 0.0
    %v134 = vadd.f32 %v132, %v133
    %v135 = vsel %vm108, %v89, 0.0
    %v136 = vadd.f32 %v134, %v135
    %v137 = vsel %vm108, %v90, 0.0
    %v138 = vadd.f32 %v136, %v137
    %v139 = vsel %vm108, %v91, 0.0
    %v140 = vadd.f32 %v138, %v139
    %141 = vadd.xlane.f32.xlu0 %v140
    %v142 = vpop.xlane.xlu0 %141
    %v145 = vlaneseq
    %v146 = vand.u32 %v145, 127
    %v147 = vperm.slane %v125, %v146
    %v148 = vperm.slane %v142, %v146
    %vm149 = vcmask 1041409
    %v150 = vsel %vm149, %v148, %v147
    %v152 = vadd.f32 %v48, %v150
    %vm153 = vcmask 25600
    %154 = vst.msk [vmem:[#allocation2] sm:$0x3] %vm153, %v152
    // Predicated region
    $region22: #{tpu_custom_call.1} parent=1 // pred_check
      %p155 = pneg %p42
    $region23: #{tpu_custom_call.1} parent=1 // pred_check_branch
      %157 = sbr.rel (%p155) target = $region25
    $region24: #{tpu_custom_call.1} parent=1 // pred_region
      %v158 = vld [vmem:[#allocation2] sm:$0x3]
      %v159 = vmul.f32 %v158, %v158
      %v160 = vsel %vm153, %v159, 0.0
      %161 = vadd.xlane.f32.xlu0 %v160
      %v162 = vpop.xlane.xlu0 %161
      %v163 = vmax.f32 %v162, 1e-24
      %v164 = vrsqrt.pop %v163
      %v165 = vmul.f32 %v164, %v163
      %v166 = vmul.f32 %v165, %v164
      %v167 = vmul.f32 0.5, %v166
      %v168 = vsub.f32 1.5, %v167
      %v169 = vmul.f32 %v164, %v168
      %vm170 = vweird.f32 %v163
      %vm171 = vweird.f32 %v164
      %vm172 = vmor %vm170, %vm171
      %v173 = vsel %vm172, %v164, %v169
      %v174 = vmul.f32 %v158, %v173
      %v175 = vld [vmem:[#allocation6] sm:$0xf]
      %vm176 = vcmask 31744
      %v178 = vsel %vm176, %v174, 0
      %v181 = vsel %vm108, %v175, 0
      %183 = vmatpush.msra.mxu0 0.0
      %184 = vmatpush.msra.mxu0 0.0
      %185 = vmatpush.msra.mxu0 0.0
      %186 = vmatpush.msra.mxu0 0.0
      %187 = vmatpush.msra.mxu0 0.0
      %188 = vmatpush.msra.mxu0 0.0
      %189 = vmatpush.msra.mxu0 0.0
      %190 = vmatpush.msra.mxu0 0.0
      %191 = vmatpush.msra.mxu0 0.0
      %192 = vmatpush.msra.mxu0 0.0
      %193 = vmatpush.msra.mxu0 0.0
      %194 = vmatpush.msra.mxu0 0.0
      %195 = vmatpush.msra.mxu0 0.0
      %196 = vmatpush.msra.mxu0 0.0
      %197 = vmatpush.msra.mxu0 0.0
      %198 = vmatpush.msra.mxu0 %v181
      %199 = vmatmul.f32.gmra.mxu0 %v178
      %v200 = vpop.f32.mrf.mxu0
      %v201 = vadd.f32 0.0, %v200
      %202 = vdwg.mxu0
      %v203 = vmul.f32 %v201, %v201
      %vm204 = vcmask 1041408
      %v205 = vsel %vm204, %v203, 0.0
      %206 = vadd.xlane.f32.xlu0 %v205
      %v207 = vpop.xlane.xlu0 %206
      %v208 = vmax.f32 %v207, 1e-24
      %v209 = vrsqrt.pop %v208
      %v210 = vmul.f32 %v209, %v208
      %v211 = vmul.f32 %v210, %v209
      %v212 = vmul.f32 0.5, %v211
      %v213 = vsub.f32 1.5, %v212
      %v214 = vmul.f32 %v209, %v213
      %vm215 = vweird.f32 %v208
      %vm216 = vweird.f32 %v209
      %vm217 = vmor %vm215, %vm216
      %v218 = vsel %vm217, %v209, %v214
      %v219 = vmul.f32 %v201, %v218
      %220 = vst [vmem:[#allocation8] sm:$0x3] %v219
    $region25: #{tpu_custom_call.1} parent=1 // pred_fallthru
      _
    // Predicated region
    $region26: #{tpu_custom_call.1} parent=1 // pred_check
      _
    $region27: #{tpu_custom_call.1} parent=1 // pred_check_branch
      %222 = sbr.rel (0) target = $region29
    $region28: #{tpu_custom_call.1} parent=1 // pred_region
      %224 = vsyncadd [#allocation5], 0
      %s226 = sshll.u32 [#allocation8], 4
      %s227 = int_to_ptr.vmem [resolvable:$true] %s226
      %s228 = sshll.u32 %s2, 4
      %s229 = int_to_ptr.hbm [resolvable:$true] %s228
      %231 = dma.vmem_to_hbm [thread:$0]  %s227, 32, %s229, [#allocation5]
    $region29: #{tpu_custom_call.1} parent=1 // pred_fallthru
      _
    // Predicated region
    $region30: #{tpu_custom_call.1} parent=1 // pred_check
      _
    $region31: #{tpu_custom_call.1} parent=1 // pred_check_branch
      %233 = sbr.rel (0) target = $region33
    $region32: #{tpu_custom_call.1} parent=1 // pred_region
      %235 = dma.done [#allocation5], 32
    $region33: #{tpu_custom_call.1} parent=1 // pred_fallthru
      _
    %236 = vsyncpa [#allocation4], 1
    %237 = vsyncpa [#allocation7], 1
    %238 = vsyncpa [#allocation5], 1

</llo_original>
